<compile_context>
chip_gen: v7x
topology: tpu7x:2x2x1
jax: 0.10.0
libtpu: 0.0.40
codegen_flags: <defaults>
</compile_context>

<pallas_src>
import functools

import jax
import jax.numpy as jnp
from jax import lax
from jax.experimental import pallas as pl
from jax.experimental.pallas import tpu as pltpu

EPS = 1e-6
LANE = 128
CHUNK = 8                 # rows processed per inner-loop iteration (one vreg)
BOXES_PER_ROW = LANE // 4 # 32 boxes per 128-lane row ([cx, cy, w, h] interleaved)
TILE_R_MAX = 1024         # rows per grid step (512 KiB / stream / buffer)

# TODO(synk): optional follow-ups from the review, left off by default:
#   - pipeline_mode=pl.Buffered(3) on the input specs if a bundle dump shows
#     exposed DMA waits on v7x.
#   - bf16 streaming of the boxes (halves HBM bytes) once validated against the
#     PyTorch reference accuracy-wise.


# ----------------------------------------------------------------------------
# pltpu.roll direction probe (resolved once, eagerly, outside jit).
# We need "out[lane] = in[lane + k]" to align cy/w/h onto each box's cx lane.
# Under np.roll semantics that is shift = LANE - k; probe once so the kernel is
# correct regardless of the rotate convention.
# ----------------------------------------------------------------------------
_FETCH_SHIFTS = None


def _resolve_roll_shifts():
    global _FETCH_SHIFTS
    if _FETCH_SHIFTS is None:
        def probe(x_ref, o_ref):
            o_ref[...] = pltpu.roll(x_ref[...], LANE - 1, axis=1)

        x = jnp.tile(jnp.arange(LANE, dtype=jnp.float32)[None, :], (8, 1))
        y = pl.pallas_call(
            probe, out_shape=jax.ShapeDtypeStruct((8, LANE), jnp.float32))(x)
        if int(y[0, 0]) == 1:
            # np.roll convention: out[i] = in[(i - shift) % n]
            _FETCH_SHIFTS = (LANE - 1, LANE - 2, LANE - 3)
        else:
            # opposite convention: out[i] = in[(i + shift) % n]
            _FETCH_SHIFTS = (1, 2, 3)
    return _FETCH_SHIFTS


def _recip(d):
    """EUP approx reciprocal + one Newton step (~exact-division accuracy)."""
    r = pl.reciprocal(d, approx=True)
    return r * (2.0 - d * r)


# ----------------------------------------------------------------------------
# Kernel
# ----------------------------------------------------------------------------
def _eiou_partial_kernel(pred_ref, tgt_ref, out_ref, *, tile_r, fetch_shifts):
    """pred_ref/tgt_ref: (tile_r, 128) f32 blocks of interleaved [cx,cy,w,h].

    out_ref: (1, 8, 128) f32 partial-sum block, resident across the step axis.
    """
    s1, s2, s3 = fetch_shifts
    step = pl.program_id(1)

    @pl.when(step == 0)
    def _init():
        out_ref[...] = jnp.zeros_like(out_ref)

    # Lanes 4b+0 hold cx of box b; only those lanes carry a valid EIoU.
    lane = jax.lax.broadcasted_iota(jnp.int32, (CHUNK, LANE), 1)
    is_box_lane = (lane & 3) == 0

    def chunk_eiou(p, t):
        # Align cy / w / h onto the cx lane with XLU lane rotations.
        pcx, tcx = p, t
        pcy = pltpu.roll(p, s1, axis=1)
        pw = pltpu.roll(p, s2, axis=1)
        ph = pltpu.roll(p, s3, axis=1)
        tcy = pltpu.roll(t, s1, axis=1)
        tw = pltpu.roll(t, s2, axis=1)
        th = pltpu.roll(t, s3, axis=1)

        phw, phh = pw * 0.5, ph * 0.5
        thw, thh = tw * 0.5, th * 0.5
        px1, px2 = pcx - phw, pcx + phw
        py1, py2 = pcy - phh, pcy + phh
        tx1, tx2 = tcx - thw, tcx + thw
        ty1, ty2 = tcy - thh, tcy + thh

        inter_w = jnp.maximum(jnp.minimum(px2, tx2) - jnp.maximum(px1, tx1), 0.0)
        inter_h = jnp.maximum(jnp.minimum(py2, ty2) - jnp.maximum(py1, ty1), 0.0)
        inter_area = inter_w * inter_h

        pred_area = (px2 - px1) * (py2 - py1)
        tgt_area = (tx2 - tx1) * (ty2 - ty1)
        union = pred_area + tgt_area - inter_area
        iou = inter_area * _recip(union + EPS)

        ew = jnp.maximum(px2, tx2) - jnp.minimum(px1, tx1)
        eh = jnp.maximum(py2, ty2) - jnp.minimum(py1, ty1)
        ew2, eh2 = ew * ew, eh * eh

        dcx, dcy = pcx - tcx, pcy - tcy
        dw, dh = pw - tw, ph - th
        center_d = dcx * dcx + dcy * dcy

        eiou = (iou
                - center_d * _recip(ew2 + eh2 + EPS)
                - (dw * dw) * _recip(ew2 + EPS)
                - (dh * dh) * _recip(eh2 + EPS))
        # Non-box lanes computed garbage (possibly inf/nan); select them out.
        # Zero-padded boxes on box lanes contribute exactly 0 (invariant [3]).
        return jnp.where(is_box_lane, eiou, 0.0)

    def body(i, part):
        r0 = pl.multiple_of(i * CHUNK, CHUNK)
        p = pred_ref[pl.ds(r0, CHUNK), :]
        t = tgt_ref[pl.ds(r0, CHUNK), :]
        return part + chunk_eiou(p, t)

    part = lax.fori_loop(0, tile_r // CHUNK, body,
                         jnp.zeros((CHUNK, LANE), jnp.float32), unroll=4)
    out_ref[...] += part[None, :, :]


# ----------------------------------------------------------------------------
# Wrapper
# ----------------------------------------------------------------------------
def _choose_layout(n_boxes):
    """Pick (tile_r, blocks, rows_pad, num_splits) with bounded padding."""
    rows = max(1, -(-n_boxes // BOXES_PER_ROW))
    slack = max(rows // 8, 7)            # <= ~12.5% padded rows (abs floor 7)
    tile_r, blocks = CHUNK, -(-rows // CHUNK)
    for cand in (1024, 512, 256, 128, 64, 32, 16, 8):
        b = -(-rows // cand)
        if b * cand - rows <= slack:
            tile_r, blocks = cand, b
            break
    # Even block count (within slack) so v7x can split the grid over 2 cores.
    if blocks % 2 == 1 and (blocks + 1) * tile_r - rows <= slack:
        blocks += 1
    rows_pad = tile_r * blocks
    num_splits = 2 if blocks % 2 == 0 else 1
    return tile_r, blocks, rows_pad, num_splits


def _interleaved_view(boxes, rows_pad):
    """(N, 4) -> (rows_pad, 128) flat interleaved view; zero tail-pad only.

    Invariant: padding is ZERO so padded boxes contribute exactly 0 EIoU.
    """
    flat = boxes.astype(jnp.float32).reshape(-1)
    need = rows_pad * LANE
    pad = need - flat.shape[0]
    if pad:
        flat = jnp.pad(flat, (0, pad))
    return flat.reshape(rows_pad, LANE)


@functools.partial(jax.jit, static_argnames=("lambda_iou", "fetch_shifts"))
def _hybrid_loss_impl(pred_boxes, target_boxes, lambda_iou, fetch_shifts):
    n = pred_boxes.shape[0]
    tile_r, blocks, rows_pad, num_splits = _choose_layout(n)
    bps = blocks // num_splits

    pred_v = _interleaved_view(pred_boxes, rows_pad)
    tgt_v = _interleaved_view(target_boxes, rows_pad)

    kernel = functools.partial(_eiou_partial_kernel, tile_r=tile_r,
                               fetch_shifts=fetch_shifts)
    partials = pl.pallas_call(
        kernel,
        out_shape=jax.ShapeDtypeStruct((num_splits, CHUNK, LANE), jnp.float32),
        grid=(num_splits, bps),
        in_specs=[
            pl.BlockSpec((tile_r, LANE), lambda c, s: (c * bps + s, 0)),
            pl.BlockSpec((tile_r, LANE), lambda c, s: (c * bps + s, 0)),
        ],
        out_specs=pl.BlockSpec((1, CHUNK, LANE), lambda c, s: (c, 0, 0)),
        compiler_params=pltpu.CompilerParams(
            dimension_semantics=("parallel", "arbitrary")),
    )(pred_v, tgt_v)

    eiou_sum = jnp.sum(partials)
    # Matches PyTorch: mean over an empty tensor (n == 0) yields NaN (0/0).
    iou_loss = 1.0 - eiou_sum / jnp.float32(n)
    total_loss = lambda_iou * iou_loss
    return total_loss, iou_loss


def hybrid_loss(pred_deltas, target_deltas, pred_boxes, target_boxes,
                lambda_iou=1.0):
    """Mirrors HybridLoss.forward: returns (total_loss, iou_loss).

    pred_deltas / target_deltas are accepted but unused (as in the module).
    pred_boxes / target_boxes: (N, 4) [cx, cy, w, h], normalized.
    """
    del pred_deltas, target_deltas
    shifts = _resolve_roll_shifts()
    return _hybrid_loss_impl(pred_boxes, target_boxes,
                             lambda_iou=float(lambda_iou),
                             fetch_shifts=shifts)


if __name__ == "__main__":
    key = jax.random.PRNGKey(0)
    k1, k2, k3, k4 = jax.random.split(key, 4)

    N = 8
    pred_boxes = jnp.concatenate(
        [jax.random.uniform(k1, (N, 2), minval=0.2, maxval=0.8),
         jax.random.uniform(k2, (N, 2), minval=0.05, maxval=0.3)],
        axis=1).astype(jnp.float32)
    target_boxes = jnp.concatenate(
        [jax.random.uniform(k3, (N, 2), minval=0.2, maxval=0.8),
         jax.random.uniform(k4, (N, 2), minval=0.05, maxval=0.3)],
        axis=1).astype(jnp.float32)
    pred_deltas = jnp.zeros((N, 4), jnp.float32)    # unused, signature parity
    target_deltas = jnp.zeros((N, 4), jnp.float32)  # unused, signature parity

    total_loss, iou_loss = hybrid_loss(pred_deltas, target_deltas,
                                       pred_boxes, target_boxes,
                                       lambda_iou=1.0)
    jax.block_until_ready((total_loss, iou_loss))
    print("KERNEL_OK")
</pallas_src>

<mosaic_0001>
module attributes {stable_mosaic.version = 11 : i64} {
  func.func @probe(%arg0: memref<8x128xf32, #tpu.memory_space<vmem>>, %arg1: memref<8x128xf32, #tpu.memory_space<vmem>>) attributes {dimension_semantics = [], scalar_prefetch = 0 : i64, scratch_operands = 0 : i64, tpu.core_type = #tpu.core_type<tc>} {
    %c0 = arith.constant 0 : index
    %c0_0 = arith.constant 0 : index
    %0 = vector.load %arg0[%c0, %c0_0] : memref<8x128xf32, #tpu.memory_space<vmem>>, vector<8x128xf32>
    %c127_i32 = arith.constant 127 : i32
    %1 = tpu.dynamic_rotate %0 by %c127_i32 dim 1 : vector<8x128xf32>, i32 -> vector<8x128xf32>
    %c0_1 = arith.constant 0 : index
    %c0_2 = arith.constant 0 : index
    %2 = vector.load %arg1[%c0_1, %c0_2] : memref<8x128xf32, #tpu.memory_space<vmem>>, vector<8x128xf32>
    tpu.vector_store %arg1[%c0_1, %c0_2], %1 {strides = array<i32>} : memref<8x128xf32, #tpu.memory_space<vmem>>, vector<8x128xf32>,
    return
  }
}

</mosaic_0001>

<llo_original>
// kernel: tpu_custom_call.1
$region0: #{tpu_custom_call.1}
  #allocation0 [shape = 'u32[]', space=smem, size = 0x4, offset = 0x4, fixed_abs, tag = 'smem constant byte address 0x4 - core index']
  #allocation1 [shape = 'u32[144,128]{1,0:T(1,128)}', space=vmem, size = 0x12000, scoped, tag = 'internal scratch']
  %s0 = inlined_call_operand.hbm [shape: f32[8,128], index: 0, kind: input, shape index: {}]
  %s1 = inlined_call_operand.hbm [shape: f32[8,128], index: 1, kind: output, shape index: {}]
  %s2 = sld [smem:[#allocation0]]
  $region18: #{tpu_custom_call.1} parent=0
    _
  %s4 = ssub.s32 1, %s2
  %s5 = scalar_select 0, %s4, %s2
  $region1: #{tpu_custom_call.1} parent=0
    #allocation2 [shape = 'u8[4096]{0}', space=vmem, size = 0x1000, scoped, tag = 'input window, operand 0, single buffered']
    #allocation3 [shape = 's32[1]{0}', space=sflag, size = 0x4, scoped, tag = 'scoped memory for tpu_custom_call.1']
    #allocation4 [shape = 's32[1]{0}', space=sflag, size = 0x4, scoped, tag = 'scoped memory for tpu_custom_call.1']
    #allocation5 [shape = 'u8[4096]{0}', space=vmem, size = 0x1000, scoped, tag = 'output window, operand 0, single buffered']
    %6 = vsyncpa [#allocation3], 0
    %7 = vsyncpa [#allocation4], 0
    // Predicated region
    $region2: #{tpu_custom_call.1} parent=1 // pred_check
      _
    $region3: #{tpu_custom_call.1} parent=1 // pred_check_branch
      %9 = sbr.rel (0) target = $region5
    $region4: #{tpu_custom_call.1} parent=1 // pred_region
      %s11 = ssub.s32 128, 128
      %12 = vsyncadd [#allocation3], %s11
      %s14 = sshll.u32 [#allocation2], 4
      %s15 = int_to_ptr.vmem [resolvable:$true] %s14
      %17 = dma.hbm_to_vmem [thread:$0]  %s0, 128, %s15, [#allocation3]
    $region5: #{tpu_custom_call.1} parent=1 // pred_fallthru
      _
    // Predicated region
    $region6: #{tpu_custom_call.1} parent=1 // pred_check
      _
    $region7: #{tpu_custom_call.1} parent=1 // pred_check_branch
      %19 = sbr.rel (0) target = $region9
    $region8: #{tpu_custom_call.1} parent=1 // pred_region
      %20 = dma.done [#allocation3], 128
    $region9: #{tpu_custom_call.1} parent=1 // pred_fallthru
      _
    %v21 = vld [vmem:[#allocation2] sm:$0xff]
    %22 = vrot.lane.b32.xlu0 %v21, 127
    %v23 = vpop.permute.xlu0 %22
    %24 = vst [vmem:[#allocation5] sm:$0xff] %v23
    // Predicated region
    $region10: #{tpu_custom_call.1} parent=1 // pred_check
      _
    $region11: #{tpu_custom_call.1} parent=1 // pred_check_branch
      %26 = sbr.rel (0) target = $region13
    $region12: #{tpu_custom_call.1} parent=1 // pred_region
      %s28 = ssub.s32 128, 128
      %29 = vsyncadd [#allocation4], %s28
      %s31 = sshll.u32 [#allocation5], 4
      %s32 = int_to_ptr.vmem [resolvable:$true] %s31
      %34 = dma.vmem_to_hbm [thread:$0]  %s32, 128, %s1, [#allocation4]
    $region13: #{tpu_custom_call.1} parent=1 // pred_fallthru
      _
    // Predicated region
    $region14: #{tpu_custom_call.1} parent=1 // pred_check
      _
    $region15: #{tpu_custom_call.1} parent=1 // pred_check_branch
      %36 = sbr.rel (0) target = $region17
    $region16: #{tpu_custom_call.1} parent=1 // pred_region
      %37 = dma.done [#allocation4], 128
    $region17: #{tpu_custom_call.1} parent=1 // pred_fallthru
      _
    %38 = vsyncpa [#allocation3], 1
    %39 = vsyncpa [#allocation4], 1

</llo_original>
